<compile_context>
chip_gen: v7x
topology: tpu7x:2x2x1
jax: 0.10.0
libtpu: 0.0.40
codegen_flags: <defaults>
</compile_context>

<pallas_src>
import functools

import jax
import jax.numpy as jnp
from jax import lax
from jax.experimental import pallas as pl
from jax.experimental.pallas import tpu as pltpu

OUT_LANES = 128  # lane-dense packed-output width (actor | critic | padding)


def _actor_critic_kernel(x_ref, w1_ref, b1_ref, w2_ref, b2_ref,
                         wh_ref, bh_ref, wc_ref, bc_ref, out_ref,
                         *, action_space):
    A = action_space
    x = x_ref[0].astype(jnp.float32)                       # (B, D)

    # F.normalize(x, dim=0): per-column L2 normalization, eps = 1e-12.
    # rsqrt(max(sumsq, eps^2)) == 1 / max(norm, eps), runs on the EUP slot.
    sumsq = jnp.sum(x * x, axis=0, keepdims=True)
    x = x * lax.rsqrt(jnp.maximum(sumsq, 1e-24))

    # l1 -> relu   (bf16 MXU operands, f32 accumulate, f32 elementwise)
    h1 = jnp.dot(x.astype(jnp.bfloat16), w1_ref[...],
                 preferred_element_type=jnp.float32) + b1_ref[...]
    h1 = jnp.maximum(h1, 0.0)

    # l2 -> relu
    h2 = jnp.dot(h1.astype(jnp.bfloat16), w2_ref[...],
                 preferred_element_type=jnp.float32) + b2_ref[...]
    h2 = jnp.maximum(h2, 0.0)

    # Fused heads: [actor_lin | l3] in a single matmul, then static slices.
    heads = jnp.dot(h2.astype(jnp.bfloat16), wh_ref[...],
                    preferred_element_type=jnp.float32) + bh_ref[...]
    logits = heads[:, :A]                                   # (B, A)
    h3 = jnp.maximum(heads[:, A:], 0.0)                     # (B, 25)

    # actor head: log_softmax(dim=1)
    m = jnp.max(logits, axis=1, keepdims=True)
    shifted = logits - m
    lse = jnp.log(jnp.sum(jnp.exp(shifted), axis=1, keepdims=True))
    log_probs = shifted - lse                               # (B, A)

    # critic head: critic_lin -> tanh
    c = jnp.dot(h3.astype(jnp.bfloat16), wc_ref[...],
                preferred_element_type=jnp.float32) + bc_ref[...]
    critic = jnp.tanh(c)                                    # (B, 1)

    # Pack both heads into one lane-dense (B, 128) slab -> one unmasked store.
    B = log_probs.shape[0]
    pad = jnp.zeros((B, OUT_LANES - A - 1), jnp.float32)
    out_ref[0] = jnp.concatenate([log_probs, critic, pad], axis=1)


def actor_critic_forward(x, params, action_space):
    """x: (T, B, input_size) — T independent forward calls of the module."""
    T, B, D = x.shape
    kernel = functools.partial(_actor_critic_kernel, action_space=action_space)

    def const_spec(a):
        # Same block index for every grid step -> parameter stays VMEM-resident.
        return pl.BlockSpec(a.shape, lambda t, _nd=a.ndim: (0,) * _nd)

    weights = (params["w1"], params["b1"], params["w2"], params["b2"],
               params["wh"], params["bh"], params["wc"], params["bc"])

    packed = pl.pallas_call(
        kernel,
        out_shape=jax.ShapeDtypeStruct((T, B, OUT_LANES), jnp.float32),
        grid=(T,),
        in_specs=[pl.BlockSpec((1, B, D), lambda t: (t, 0, 0))]
                 + [const_spec(a) for a in weights],
        out_specs=pl.BlockSpec((1, B, OUT_LANES), lambda t: (t, 0, 0)),
        compiler_params=pltpu.CompilerParams(
            dimension_semantics=("parallel",)),   # v7x: shard T across 2 TCs
    )(x, *weights)

    actor = packed[:, :, :action_space]
    critic = packed[:, :, action_space:action_space + 1]
    return actor, critic


def init_linear(key, fan_in, fan_out):
    # Mimics PyTorch nn.Linear default init U(-1/sqrt(fan_in), 1/sqrt(fan_in)),
    # stored transposed as (in, out). Weights bf16 (MXU), biases f32.
    kw, kb = jax.random.split(key)
    bound = 1.0 / jnp.sqrt(jnp.float32(fan_in))
    w = jax.random.uniform(kw, (fan_in, fan_out), jnp.float32, -bound, bound)
    b = jax.random.uniform(kb, (1, fan_out), jnp.float32, -bound, bound)
    return w.astype(jnp.bfloat16), b


def reference_forward(x, p, action_space):
    """Pure-JAX per-timestep reference with matching bf16 matmul operands."""
    def dot(a, w):
        return jnp.dot(a.astype(jnp.bfloat16), w,
                       preferred_element_type=jnp.float32)

    def one_step(xt):
        xn = xt * lax.rsqrt(
            jnp.maximum(jnp.sum(xt * xt, axis=0, keepdims=True), 1e-24))
        h1 = jax.nn.relu(dot(xn, p["w1"]) + p["b1"])
        h2 = jax.nn.relu(dot(h1, p["w2"]) + p["b2"])
        heads = dot(h2, p["wh"]) + p["bh"]
        actor = jax.nn.log_softmax(heads[:, :action_space], axis=1)
        h3 = jax.nn.relu(heads[:, action_space:])
        critic = jnp.tanh(dot(h3, p["wc"]) + p["bc"])
        return actor, critic

    return jax.vmap(one_step)(x)


if __name__ == "__main__":
    input_size = 32
    action_space = 4
    batch = 8        # rows per forward call (sublane-aligned); grow to >=128
                     # per step to fill the MXU when the workload allows.
    timesteps = 4    # rollout steps folded into the pallas grid

    root = jax.random.PRNGKey(0)
    kx, k1, k2, ka, k3, kc = jax.random.split(root, 6)

    x = jax.random.normal(kx, (timesteps, batch, input_size), jnp.float32)

    w1, b1 = init_linear(k1, input_size, 25)
    w2, b2 = init_linear(k2, 25, 50)
    wa, ba = init_linear(ka, 50, action_space)
    w3, b3 = init_linear(k3, 50, 25)
    wc, bc = init_linear(kc, 25, 1)

    params = {
        "w1": w1, "b1": b1,
        "w2": w2, "b2": b2,
        "wh": jnp.concatenate([wa, w3], axis=1),   # fused [actor_lin | l3]
        "bh": jnp.concatenate([ba, b3], axis=1),
        "wc": wc, "bc": bc,
    }

    actor, critic = actor_critic_forward(x, params, action_space)
    actor, critic = jax.block_until_ready((actor, critic))

    actor_ref, critic_ref = reference_forward(x, params, action_space)
    assert actor.shape == (timesteps, batch, action_space)
    assert critic.shape == (timesteps, batch, 1)
    assert jnp.allclose(actor, actor_ref, rtol=2e-3, atol=2e-3), \
        float(jnp.max(jnp.abs(actor - actor_ref)))
    assert jnp.allclose(critic, critic_ref, rtol=2e-3, atol=2e-3), \
        float(jnp.max(jnp.abs(critic - critic_ref)))

    print("KERNEL_OK")
</pallas_src>

<mosaic_0001>
module attributes {stable_mosaic.version = 11 : i64} {
  func.func @_actor_critic_kernel(%arg0: i32, %arg1: memref<1x8x32xf32, #tpu.memory_space<vmem>>, %arg2: memref<32x25xbf16, #tpu.memory_space<vmem>>, %arg3: memref<1x25xf32, #tpu.memory_space<vmem>>, %arg4: memref<25x50xbf16, #tpu.memory_space<vmem>>, %arg5: memref<1x50xf32, #tpu.memory_space<vmem>>, %arg6: memref<50x29xbf16, #tpu.memory_space<vmem>>, %arg7: memref<1x29xf32, #tpu.memory_space<vmem>>, %arg8: memref<25x1xbf16, #tpu.memory_space<vmem>>, %arg9: memref<1x1xf32, #tpu.memory_space<vmem>>, %arg10: memref<1x8x128xf32, #tpu.memory_space<vmem>>) attributes {dimension_semantics = [#tpu.dimension_semantics<parallel>], iteration_bounds = array<i64: 4>, scalar_prefetch = 0 : i64, scratch_operands = 0 : i64, tpu.core_type = #tpu.core_type<tc>, window_params = [{transform_indices = @transform_0, window_bounds = array<i64: 1, 8, 32>}, {pipeline_mode = #tpu.pipeline_mode<synchronous>, transform_indices = @transform_1, window_bounds = array<i64: 32, 25>}, {pipeline_mode = #tpu.pipeline_mode<synchronous>, transform_indices = @transform_2, window_bounds = array<i64: 1, 25>}, {pipeline_mode = #tpu.pipeline_mode<synchronous>, transform_indices = @transform_3, window_bounds = array<i64: 25, 50>}, {pipeline_mode = #tpu.pipeline_mode<synchronous>, transform_indices = @transform_4, window_bounds = array<i64: 1, 50>}, {pipeline_mode = #tpu.pipeline_mode<synchronous>, transform_indices = @transform_5, window_bounds = array<i64: 50, 29>}, {pipeline_mode = #tpu.pipeline_mode<synchronous>, transform_indices = @transform_6, window_bounds = array<i64: 1, 29>}, {pipeline_mode = #tpu.pipeline_mode<synchronous>, transform_indices = @transform_7, window_bounds = array<i64: 25, 1>}, {pipeline_mode = #tpu.pipeline_mode<synchronous>, transform_indices = @transform_8, window_bounds = array<i64: 1, 1>}, {transform_indices = @transform_9, window_bounds = array<i64: 1, 8, 128>}]} {
    %c0 = arith.constant 0 : index
    %c0_0 = arith.constant 0 : index
    %c0_1 = arith.constant 0 : index
    %0 = vector.load %arg1[%c0, %c0_0, %c0_1] : memref<1x8x32xf32, #tpu.memory_space<vmem>>, vector<1x8x32xf32>
    %1 = vector.shape_cast %0 : vector<1x8x32xf32> to vector<8x32xf32>
    %2 = arith.mulf %1, %1 : vector<8x32xf32>
    %cst = arith.constant dense<0.000000e+00> : vector<32xf32>
    %3 = vector.multi_reduction <add>, %2, %cst [0] : vector<8x32xf32> to vector<32xf32>
    %4 = vector.shape_cast %3 : vector<32xf32> to vector<1x32xf32>
    %cst_2 = arith.constant 1.000000e-24 : f32
    %5 = vector.broadcast %cst_2 : f32 to vector<1x32xf32>
    %6 = arith.maximumf %4, %5 : vector<1x32xf32>
    %7 = math.rsqrt %6 : vector<1x32xf32>
    %8 = vector.broadcast %7 : vector<1x32xf32> to vector<8x32xf32>
    %9 = arith.mulf %1, %8 : vector<8x32xf32>
    %10 = arith.truncf %9 : vector<8x32xf32> to vector<8x32xbf16>
    %c0_3 = arith.constant 0 : index
    %c0_4 = arith.constant 0 : index
    %11 = vector.load %arg2[%c0_3, %c0_4] : memref<32x25xbf16, #tpu.memory_space<vmem>>, vector<32x25xbf16>
    %cst_5 = arith.constant dense<0.000000e+00> : vector<8x25xf32>
    %12 = tpu.matmul %10, %11, %cst_5 {dimension_numbers = #tpu.dot_dimension_numbers<[1], [0], [0], [1], [0, 0, 1, 1], [], []>} : vector<8x32xbf16>, vector<32x25xbf16>, vector<8x25xf32> -> vector<8x25xf32>
    %c0_6 = arith.constant 0 : index
    %c0_7 = arith.constant 0 : index
    %13 = vector.load %arg3[%c0_6, %c0_7] : memref<1x25xf32, #tpu.memory_space<vmem>>, vector<1x25xf32>
    %14 = vector.broadcast %13 : vector<1x25xf32> to vector<8x25xf32>
    %15 = arith.addf %12, %14 : vector<8x25xf32>
    %cst_8 = arith.constant 0.000000e+00 : f32
    %16 = vector.broadcast %cst_8 : f32 to vector<8x25xf32>
    %17 = arith.maximumf %15, %16 : vector<8x25xf32>
    %18 = arith.truncf %17 : vector<8x25xf32> to vector<8x25xbf16>
    %c0_9 = arith.constant 0 : index
    %c0_10 = arith.constant 0 : index
    %19 = vector.load %arg4[%c0_9, %c0_10] : memref<25x50xbf16, #tpu.memory_space<vmem>>, vector<25x50xbf16>
    %cst_11 = arith.constant dense<0.000000e+00> : vector<8x50xf32>
    %20 = tpu.matmul %18, %19, %cst_11 {dimension_numbers = #tpu.dot_dimension_numbers<[1], [0], [0], [1], [0, 0, 1, 1], [], []>} : vector<8x25xbf16>, vector<25x50xbf16>, vector<8x50xf32> -> vector<8x50xf32>
    %c0_12 = arith.constant 0 : index
    %c0_13 = arith.constant 0 : index
    %21 = vector.load %arg5[%c0_12, %c0_13] : memref<1x50xf32, #tpu.memory_space<vmem>>, vector<1x50xf32>
    %22 = vector.broadcast %21 : vector<1x50xf32> to vector<8x50xf32>
    %23 = arith.addf %20, %22 : vector<8x50xf32>
    %cst_14 = arith.constant 0.000000e+00 : f32
    %24 = vector.broadcast %cst_14 : f32 to vector<8x50xf32>
    %25 = arith.maximumf %23, %24 : vector<8x50xf32>
    %26 = arith.truncf %25 : vector<8x50xf32> to vector<8x50xbf16>
    %c0_15 = arith.constant 0 : index
    %c0_16 = arith.constant 0 : index
    %27 = vector.load %arg6[%c0_15, %c0_16] : memref<50x29xbf16, #tpu.memory_space<vmem>>, vector<50x29xbf16>
    %cst_17 = arith.constant dense<0.000000e+00> : vector<8x29xf32>
    %28 = tpu.matmul %26, %27, %cst_17 {dimension_numbers = #tpu.dot_dimension_numbers<[1], [0], [0], [1], [0, 0, 1, 1], [], []>} : vector<8x50xbf16>, vector<50x29xbf16>, vector<8x29xf32> -> vector<8x29xf32>
    %c0_18 = arith.constant 0 : index
    %c0_19 = arith.constant 0 : index
    %29 = vector.load %arg7[%c0_18, %c0_19] : memref<1x29xf32, #tpu.memory_space<vmem>>, vector<1x29xf32>
    %30 = vector.broadcast %29 : vector<1x29xf32> to vector<8x29xf32>
    %31 = arith.addf %28, %30 : vector<8x29xf32>
    %32 = vector.extract_strided_slice %31 {offsets = [0, 0], sizes = [8, 4], strides = [1, 1]} : vector<8x29xf32> to vector<8x4xf32>
    %33 = vector.extract_strided_slice %31 {offsets = [0, 4], sizes = [8, 25], strides = [1, 1]} : vector<8x29xf32> to vector<8x25xf32>
    %cst_20 = arith.constant 0.000000e+00 : f32
    %34 = vector.broadcast %cst_20 : f32 to vector<8x25xf32>
    %35 = arith.maximumf %33, %34 : vector<8x25xf32>
    %cst_21 = arith.constant dense<0xFF800000> : vector<8xf32>
    %36 = vector.multi_reduction <maximumf>, %32, %cst_21 [1] : vector<8x4xf32> to vector<8xf32>
    %37 = vector.shape_cast %36 : vector<8xf32> to vector<8x1xf32>
    %38 = vector.broadcast %37 : vector<8x1xf32> to vector<8x4xf32>
    %39 = arith.subf %32, %38 : vector<8x4xf32>
    %40 = math.exp %39 : vector<8x4xf32>
    %cst_22 = arith.constant dense<0.000000e+00> : vector<8xf32>
    %41 = vector.multi_reduction <add>, %40, %cst_22 [1] : vector<8x4xf32> to vector<8xf32>
    %42 = vector.shape_cast %41 : vector<8xf32> to vector<8x1xf32>
    %43 = math.log %42 : vector<8x1xf32>
    %44 = vector.broadcast %43 : vector<8x1xf32> to vector<8x4xf32>
    %45 = arith.subf %39, %44 : vector<8x4xf32>
    %46 = arith.truncf %35 : vector<8x25xf32> to vector<8x25xbf16>
    %c0_23 = arith.constant 0 : index
    %c0_24 = arith.constant 0 : index
    %47 = vector.load %arg8[%c0_23, %c0_24] : memref<25x1xbf16, #tpu.memory_space<vmem>>, vector<25x1xbf16>
    %cst_25 = arith.constant dense<0.000000e+00> : vector<8x1xf32>
    %48 = tpu.matmul %46, %47, %cst_25 {dimension_numbers = #tpu.dot_dimension_numbers<[1], [0], [0], [1], [0, 0, 1, 1], [], []>} : vector<8x25xbf16>, vector<25x1xbf16>, vector<8x1xf32> -> vector<8x1xf32>
    %c0_26 = arith.constant 0 : index
    %c0_27 = arith.constant 0 : index
    %49 = vector.load %arg9[%c0_26, %c0_27] : memref<1x1xf32, #tpu.memory_space<vmem>>, vector<1x1xf32>
    %50 = vector.broadcast %49 : vector<1x1xf32> to vector<8x1xf32>
    %51 = arith.addf %48, %50 : vector<8x1xf32>
    %52 = math.tanh %51 : vector<8x1xf32>
    %cst_28 = arith.constant 0.000000e+00 : f32
    %53 = vector.broadcast %cst_28 : f32 to vector<8x123xf32>
    %54 = tpu.concatenate %45, %52, %53 in 1 : vector<8x4xf32>, vector<8x1xf32>, vector<8x123xf32> -> vector<8x128xf32>
    %c0_29 = arith.constant 0 : index
    %c0_30 = arith.constant 0 : index
    %c0_31 = arith.constant 0 : index
    %55 = vector.load %arg10[%c0_29, %c0_30, %c0_31] : memref<1x8x128xf32, #tpu.memory_space<vmem>>, vector<1x8x128xf32>
    %56 = vector.shape_cast %55 : vector<1x8x128xf32> to vector<8x128xf32>
    %57 = vector.shape_cast %54 : vector<8x128xf32> to vector<1x8x128xf32>
    tpu.vector_store %arg10[%c0_29, %c0_30, %c0_31], %57 {strides = array<i32>} : memref<1x8x128xf32, #tpu.memory_space<vmem>>, vector<1x8x128xf32>,
    return
  }
  func.func @transform_0(%arg0: i32) -> (i32, i32, i32) {
    %c0_i32 = arith.constant 0 : i32
    %c0_i32_0 = arith.constant 0 : i32
    %c0_i32_1 = arith.constant 0 : i32
    return %arg0, %c0_i32, %c0_i32_0 : i32, i32, i32
  }
  func.func @transform_1(%arg0: i32) -> (i32, i32) {
    %c0_i32 = arith.constant 0 : i32
    %c0_i32_0 = arith.constant 0 : i32
    %c0_i32_1 = arith.constant 0 : i32
    return %c0_i32, %c0_i32_0 : i32, i32
  }
  func.func @transform_2(%arg0: i32) -> (i32, i32) {
    %c0_i32 = arith.constant 0 : i32
    %c0_i32_0 = arith.constant 0 : i32
    %c0_i32_1 = arith.constant 0 : i32
    return %c0_i32, %c0_i32_0 : i32, i32
  }
  func.func @transform_3(%arg0: i32) -> (i32, i32) {
    %c0_i32 = arith.constant 0 : i32
    %c0_i32_0 = arith.constant 0 : i32
    %c0_i32_1 = arith.constant 0 : i32
    return %c0_i32, %c0_i32_0 : i32, i32
  }
  func.func @transform_4(%arg0: i32) -> (i32, i32) {
    %c0_i32 = arith.constant 0 : i32
    %c0_i32_0 = arith.constant 0 : i32
    %c0_i32_1 = arith.constant 0 : i32
    return %c0_i32, %c0_i32_0 : i32, i32
  }
  func.func @transform_5(%arg0: i32) -> (i32, i32) {
    %c0_i32 = arith.constant 0 : i32
    %c0_i32_0 = arith.constant 0 : i32
    %c0_i32_1 = arith.constant 0 : i32
    return %c0_i32, %c0_i32_0 : i32, i32
  }
  func.func @transform_6(%arg0: i32) -> (i32, i32) {
    %c0_i32 = arith.constant 0 : i32
    %c0_i32_0 = arith.constant 0 : i32
    %c0_i32_1 = arith.constant 0 : i32
    return %c0_i32, %c0_i32_0 : i32, i32
  }
  func.func @transform_7(%arg0: i32) -> (i32, i32) {
    %c0_i32 = arith.constant 0 : i32
    %c0_i32_0 = arith.constant 0 : i32
    %c0_i32_1 = arith.constant 0 : i32
    return %c0_i32, %c0_i32_0 : i32, i32
  }
  func.func @transform_8(%arg0: i32) -> (i32, i32) {
    %c0_i32 = arith.constant 0 : i32
    %c0_i32_0 = arith.constant 0 : i32
    %c0_i32_1 = arith.constant 0 : i32
    return %c0_i32, %c0_i32_0 : i32, i32
  }
  func.func @transform_9(%arg0: i32) -> (i32, i32, i32) {
    %c0_i32 = arith.constant 0 : i32
    %c0_i32_0 = arith.constant 0 : i32
    %c0_i32_1 = arith.constant 0 : i32
    return %arg0, %c0_i32, %c0_i32_0 : i32, i32, i32
  }
}

</mosaic_0001>

<llo_original>
// kernel: tpu_custom_call.1
$region0: #{tpu_custom_call.1}
  #allocation0 [shape = 'u32[]', space=smem, size = 0x4, offset = 0x4, fixed_abs, tag = 'smem constant byte address 0x4 - core index']
  #allocation1 [shape = 'u32[144,128]{1,0:T(1,128)}', space=vmem, size = 0x12000, scoped, tag = 'internal scratch']
  #allocation2 [shape = 'f32[1,1]{1,0:T(1,128)S(1)}', space=vmem, size = 0x200, scoped, tag = 'scoped memory for tpu_custom_call.1']
  %s0 = inlined_call_operand.vmem [shape: f32[4,8,32], index: 0, kind: input, shape index: {}]
  %s1 = inlined_call_operand.vmem [shape: bf16[32,25], index: 1, kind: input, shape index: {}]
  %s2 = inlined_call_operand.vmem [shape: f32[1,25], index: 2, kind: input, shape index: {}]
  %s3 = inlined_call_operand.vmem [shape: bf16[25,50], index: 3, kind: input, shape index: {}]
  %s4 = inlined_call_operand.vmem [shape: f32[1,50], index: 4, kind: input, shape index: {}]
  %s5 = inlined_call_operand.vmem [shape: bf16[50,29], index: 5, kind: input, shape index: {}]
  %s6 = inlined_call_operand.vmem [shape: f32[1,29], index: 6, kind: input, shape index: {}]
  %s7 = inlined_call_operand.vmem [shape: bf16[25,1], index: 7, kind: input, shape index: {}]
  %s8 = inlined_call_operand.<no memory space> [shape: f32[1,1], index: 8, kind: input, shape index: {}]
  %s9 = inlined_call_operand.hbm [shape: f32[4,8,128], index: 9, kind: output, shape index: {}]
  %s10 = sld [smem:[#allocation0]]
  $region69: #{tpu_custom_call.1} parent=0
    _
  %s12 = ssub.s32 1, %s10
  %s13 = scalar_select 0, %s12, %s10
  %v14 = vstv %s8
  %15 = vst [vmem:[#allocation2] sm:$0x1] %v14
  $region1: #{tpu_custom_call.1} parent=0
    #allocation3 [shape = 'u8[8192]{0}', space=vmem, size = 0x2000, scoped, tag = 'output window, operand 0']
    #allocation4 [shape = 's32[2]{0}', space=sflag, size = 0x8, scoped, tag = 'scoped memory for tpu_custom_call.1']
    %16 = vsyncpa [#allocation4], 0
    %s17 = scalar_lea.sflag [#allocation4], 1
    %18 = vsyncpa %s17, 0
    loop: start=0, step=1, limit=6
    $region2: #{tpu_custom_call.1} parent=1 // loop_pre_header
      _
    $region3: #{tpu_custom_call.1} parent=1 // loop_header
      %s20 = sphi 0, %s24
      %p21 = scmp.ge.s32.totalorder %s20, 6
      %s30 = sphi 0, %s32
      %s33 = sphi 0, %s30
      %s34 = sphi 0, %s33
      %s50 = sphi 0, %s34
      %s54 = sphi 0, %s54
      %s56 = sphi 0, %s54
      %s57 = sphi 0, %s56
      %s71 = sphi 0, %s57
      %s75 = sphi 0, %s75
      %s77 = sphi 0, %s75
      %s78 = sphi 0, %s77
      %s92 = sphi 0, %s78
      %s96 = sphi 0, %s96
      %s98 = sphi 0, %s96
      %s99 = sphi 0, %s98
      %s113 = sphi 0, %s99
      %s117 = sphi 0, %s117
      %s119 = sphi 0, %s117
      %s120 = sphi 0, %s119
      %s134 = sphi 0, %s120
      %s138 = sphi 0, %s138
      %s140 = sphi 0, %s138
      %s141 = sphi 0, %s140
      %s155 = sphi 0, %s141
      %s159 = sphi 0, %s159
      %s161 = sphi 0, %s159
      %s162 = sphi 0, %s161
      %s176 = sphi 0, %s162
      %s180 = sphi 0, %s180
      %s182 = sphi 0, %s180
      %s183 = sphi 0, %s182
      %s197 = sphi 0, %s183
      %s201 = sphi 0, %s201
      %s203 = sphi 0, %s201
      %s204 = sphi 0, %s203
      %s218 = sphi 0, %s204
      %s224 = sphi 0, %s226
      %s227 = sphi 0, %s224
      %s228 = sphi 0, %s227
      %s244 = sphi 0, %s228
    $region4: #{tpu_custom_call.1} parent=1 // loop_header_branch
      %23 = sbr.rel (%p21) target = $region8
    $region5: #{tpu_custom_call.1} parent=1 // loop_body
      %s25 = ssub.s32 %s20, 1
      %s26 = ssub.s32 %s20, 2
      %s27 = sadd.s32 %s20, 1
      %s28 = ssub.s32 %s20, %s27
      %p29 = scmp.eq.s32.totalorder %s28, 0
      %s31 = sadd.s32 %s30, 1
      %s32 = scalar_select %p29, %s30, %s31
      %p35 = pneg %p29
      %p36 = scmp.eq.s32.totalorder %s20, 3
      %p37 = por %p35, %p36
      %p38 = scmp.ne.s32.totalorder %s30, %s33
      %p39 = scmp.eq.s32.totalorder %s20, 0
      %p40 = por %p38, %p39
      %p41 = scmp.ne.s32.totalorder %s30, %s33
      %p42 = scmp.eq.s32.totalorder %s25, 3
      %p43 = por %p41, %p42
      %p44 = scmp.ne.s32.totalorder %s33, %s34
      %p45 = scmp.eq.s32.totalorder %s25, 0
      %p46 = por %p44, %p45
      %p47 = scmp.ne.s32.totalorder %s33, %s34
      %p48 = scmp.eq.s32.totalorder %s26, 3
      %p49 = por %p47, %p48
      %p51 = scmp.ne.s32.totalorder %s34, %s50
      %p52 = scmp.eq.s32.totalorder %s26, 0
      %p53 = por %p51, %p52
      %s55 = sadd.s32 %s54, 1
      %p58 = scmp.eq.s32.totalorder %s20, 3
      %p59 = scmp.ne.s32.totalorder %s54, %s56
      %p60 = scmp.eq.s32.totalorder %s20, 0
      %p61 = por %p59, %p60
      %p62 = scmp.ne.s32.totalorder %s54, %s56
      %p63 = scmp.eq.s32.totalorder %s25, 3
      %p64 = por %p62, %p63
      %p65 = scmp.ne.s32.totalorder %s56, %s57
      %p66 = scmp.eq.s32.totalorder %s25, 0
      %p67 = por %p65, %p66
      %p68 = scmp.ne.s32.totalorder %s56, %s57
      %p69 = scmp.eq.s32.totalorder %s26, 3
      %p70 = por %p68, %p69
      %p72 = scmp.ne.s32.totalorder %s57, %s71
      %p73 = scmp.eq.s32.totalorder %s26, 0
      %p74 = por %p72, %p73
      %s76 = sadd.s32 %s75, 1
      %p79 = scmp.eq.s32.totalorder %s20, 3
      %p80 = scmp.ne.s32.totalorder %s75, %s77
      %p81 = scmp.eq.s32.totalorder %s20, 0
      %p82 = por %p80, %p81
      %p83 = scmp.ne.s32.totalorder %s75, %s77
      %p84 = scmp.eq.s32.totalorder %s25, 3
      %p85 = por %p83, %p84
      %p86 = scmp.ne.s32.totalorder %s77, %s78
      %p87 = scmp.eq.s32.totalorder %s25, 0
      %p88 = por %p86, %p87
      %p89 = scmp.ne.s32.totalorder %s77, %s78
      %p90 = scmp.eq.s32.totalorder %s26, 3
      %p91 = por %p89, %p90
      %p93 = scmp.ne.s32.totalorder %s78, %s92
      %p94 = scmp.eq.s32.totalorder %s26, 0
      %p95 = por %p93, %p94
      %s97 = sadd.s32 %s96, 1
      %p100 = scmp.eq.s32.totalorder %s20, 3
      %p101 = scmp.ne.s32.totalorder %s96, %s98
      %p102 = scmp.eq.s32.totalorder %s20, 0
      %p103 = por %p101, %p102
      %p104 = scmp.ne.s32.totalorder %s96, %s98
      %p105 = scmp.eq.s32.totalorder %s25, 3
      %p106 = por %p104, %p105
      %p107 = scmp.ne.s32.totalorder %s98, %s99
      %p108 = scmp.eq.s32.totalorder %s25, 0
      %p109 = por %p107, %p108
      %p110 = scmp.ne.s32.totalorder %s98, %s99
      %p111 = scmp.eq.s32.totalorder %s26, 3
      %p112 = por %p110, %p111
      %p114 = scmp.ne.s32.totalorder %s99, %s113
      %p115 = scmp.eq.s32.totalorder %s26, 0
      %p116 = por %p114, %p115
      %s118 = sadd.s32 %s117, 1
      %p121 = scmp.eq.s32.totalorder %s20, 3
      %p122 = scmp.ne.s32.totalorder %s117, %s119
      %p123 = scmp.eq.s32.totalorder %s20, 0
      %p124 = por %p122, %p123
      %p125 = scmp.ne.s32.totalorder %s117, %s119
      %p126 = scmp.eq.s32.totalorder %s25, 3
      %p127 = por %p125, %p126
      %p128 = scmp.ne.s32.totalorder %s119, %s120
      %p129 = scmp.eq.s32.totalorder %s25, 0
      %p130 = por %p128, %p129
      %p131 = scmp.ne.s32.totalorder %s119, %s120
      %p132 = scmp.eq.s32.totalorder %s26, 3
      %p133 = por %p131, %p132
      %p135 = scmp.ne.s32.totalorder %s120, %s134
      %p136 = scmp.eq.s32.totalorder %s26, 0
      %p137 = por %p135, %p136
      %s139 = sadd.s32 %s138, 1
      %p142 = scmp.eq.s32.totalorder %s20, 3
      %p143 = scmp.ne.s32.totalorder %s138, %s140
      %p144 = scmp.eq.s32.totalorder %s20, 0
      %p145 = por %p143, %p144
      %p146 = scmp.ne.s32.totalorder %s138, %s140
      %p147 = scmp.eq.s32.totalorder %s25, 3
      %p148 = por %p146, %p147
      %p149 = scmp.ne.s32.totalorder %s140, %s141
      %p150 = scmp.eq.s32.totalorder %s25, 0
      %p151 = por %p149, %p150
      %p152 = scmp.ne.s32.totalorder %s140, %s141
      %p153 = scmp.eq.s32.totalorder %s26, 3
      %p154 = por %p152, %p153
      %p156 = scmp.ne.s32.totalorder %s141, %s155
      %p157 = scmp.eq.s32.totalorder %s26, 0
      %p158 = por %p156, %p157
      %s160 = sadd.s32 %s159, 1
      %p163 = scmp.eq.s32.totalorder %s20, 3
      %p164 = scmp.ne.s32.totalorder %s159, %s161
      %p165 = scmp.eq.s32.totalorder %s20, 0
      %p166 = por %p164, %p165
      %p167 = scmp.ne.s32.totalorder %s159, %s161
      %p168 = scmp.eq.s32.totalorder %s25, 3
      %p169 = por %p167, %p168
      %p170 = scmp.ne.s32.totalorder %s161, %s162
      %p171 = scmp.eq.s32.totalorder %s25, 0
      %p172 = por %p170, %p171
      %p173 = scmp.ne.s32.totalorder %s161, %s162
      %p174 = scmp.eq.s32.totalorder %s26, 3
      %p175 = por %p173, %p174
      %p177 = scmp.ne.s32.totalorder %s162, %s176
      %p178 = scmp.eq.s32.totalorder %s26, 0
      %p179 = por %p177, %p178
      %s181 = sadd.s32 %s180, 1
      %p184 = scmp.eq.s32.totalorder %s20, 3
      %p185 = scmp.ne.s32.totalorder %s180, %s182
      %p186 = scmp.eq.s32.totalorder %s20, 0
      %p187 = por %p185, %p186
      %p188 = scmp.ne.s32.totalorder %s180, %s182
      %p189 = scmp.eq.s32.totalorder %s25, 3
      %p190 = por %p188, %p189
      %p191 = scmp.ne.s32.totalorder %s182, %s183
      %p192 = scmp.eq.s32.totalorder %s25, 0
      %p193 = por %p191, %p192
      %p194 = scmp.ne.s32.totalorder %s182, %s183
      %p195 = scmp.eq.s32.totalorder %s26, 3
      %p196 = por %p194, %p195
      %p198 = scmp.ne.s32.totalorder %s183, %s197
      %p199 = scmp.eq.s32.totalorder %s26, 0
      %p200 = por %p198, %p199
      %s202 = sadd.s32 %s201, 1
      %p205 = scmp.eq.s32.totalorder %s20, 3
      %p206 = scmp.ne.s32.totalorder %s201, %s203
      %p207 = scmp.eq.s32.totalorder %s20, 0
      %p208 = por %p206, %p207
      %p209 = scmp.ne.s32.totalorder %s201, %s203
      %p210 = scmp.eq.s32.totalorder %s25, 3
      %p211 = por %p209, %p210
      %p212 = scmp.ne.s32.totalorder %s203, %s204
      %p213 = scmp.eq.s32.totalorder %s25, 0
      %p214 = por %p212, %p213
      %p215 = scmp.ne.s32.totalorder %s203, %s204
      %p216 = scmp.eq.s32.totalorder %s26, 3
      %p217 = por %p215, %p216
      %p219 = scmp.ne.s32.totalorder %s204, %s218
      %p220 = scmp.eq.s32.totalorder %s26, 0
      %p221 = por %p219, %p220
      %s222 = ssub.s32 %s20, %s27
      %p223 = scmp.eq.s32.totalorder %s222, 0
      %s225 = sadd.s32 %s224, 1
      %s226 = scalar_select %p223, %s224, %s225
      %p229 = pneg %p223
      %p230 = scmp.eq.s32.totalorder %s20, 3
      %p231 = por %p229, %p230
      %p232 = scmp.ne.s32.totalorder %s224, %s227
      %p233 = scmp.eq.s32.totalorder %s20, 0
      %p234 = por %p232, %p233
      %p235 = scmp.ne.s32.totalorder %s224, %s227
      %p236 = scmp.eq.s32.totalorder %s25, 3
      %p237 = por %p235, %p236
      %p238 = scmp.ne.s32.totalorder %s227, %s228
      %p239 = scmp.eq.s32.totalorder %s25, 0
      %p240 = por %p238, %p239
      %p241 = scmp.ne.s32.totalorder %s227, %s228
      %p242 = scmp.eq.s32.totalorder %s26, 3
      %p243 = por %p241, %p242
      %p245 = scmp.ne.s32.totalorder %s228, %s244
      %p246 = scmp.eq.s32.totalorder %s26, 0
      %p247 = por %p245, %p246
      %p248 = scmp.le.s32.totalorder 1, %s20
      %p249 = scmp.lt.s32.totalorder %s20, 5
      %p250 = pnand %p248, %p249
      %p251 = pneg %p250
      // Predicated region
      $region9: #{tpu_custom_call.1} parent=5 // pred_check
        _
      $region10: #{tpu_custom_call.1} parent=5 // pred_check_branch
        %253 = sbr.rel (%p250) target = $region12
      $region11: #{tpu_custom_call.1} parent=5 // pred_region
        %s254 = ssub.s32 %s20, 1
        // Predicated region
        $region13: #{tpu_custom_call.1} parent=11 // pred_check
          %p255 = pneg %p67
        $region14: #{tpu_custom_call.1} parent=11 // pred_check_branch
          %257 = sbr.rel (%p255) target = $region16
        $region15: #{tpu_custom_call.1} parent=11 // pred_region
          _
        $region16: #{tpu_custom_call.1} parent=11 // pred_fallthru
          _
        // Predicated region
        $region17: #{tpu_custom_call.1} parent=11 // pred_check
          %p258 = pneg %p88
        $region18: #{tpu_custom_call.1} parent=11 // pred_check_branch
          %260 = sbr.rel (%p258) target = $region20
        $region19: #{tpu_custom_call.1} parent=11 // pred_region
          _
        $region20: #{tpu_custom_call.1} parent=11 // pred_fallthru
          _
        // Predicated region
        $region21: #{tpu_custom_call.1} parent=11 // pred_check
          %p261 = pneg %p109
        $region22: #{tpu_custom_call.1} parent=11 // pred_check_branch
          %263 = sbr.rel (%p261) target = $region24
        $region23: #{tpu_custom_call.1} parent=11 // pred_region
          _
        $region24: #{tpu_custom_call.1} parent=11 // pred_fallthru
          _
        // Predicated region
        $region25: #{tpu_custom_call.1} parent=11 // pred_check
          %p264 = pneg %p130
        $region26: #{tpu_custom_call.1} parent=11 // pred_check_branch
          %266 = sbr.rel (%p264) target = $region28
        $region27: #{tpu_custom_call.1} parent=11 // pred_region
          _
        $region28: #{tpu_custom_call.1} parent=11 // pred_fallthru
          _
        // Predicated region
        $region29: #{tpu_custom_call.1} parent=11 // pred_check
          %p267 = pneg %p151
        $region30: #{tpu_custom_call.1} parent=11 // pred_check_branch
          %269 = sbr.rel (%p267) target = $region32
        $region31: #{tpu_custom_call.1} parent=11 // pred_region
          _
        $region32: #{tpu_custom_call.1} parent=11 // pred_fallthru
          _
        // Predicated region
        $region33: #{tpu_custom_call.1} parent=11 // pred_check
          %p270 = pneg %p172
        $region34: #{tpu_custom_call.1} parent=11 // pred_check_branch
          %272 = sbr.rel (%p270) target = $region36
        $region35: #{tpu_custom_call.1} parent=11 // pred_region
          _
        $region36: #{tpu_custom_call.1} parent=11 // pred_fallthru
          _
        // Predicated region
        $region37: #{tpu_custom_call.1} parent=11 // pred_check
          %p273 = pneg %p193
        $region38: #{tpu_custom_call.1} parent=11 // pred_check_branch
          %275 = sbr.rel (%p273) target = $region40
        $region39: #{tpu_custom_call.1} parent=11 // pred_region
          _
        $region40: #{tpu_custom_call.1} parent=11 // pred_fallthru
          _
        // Predicated region
        $region41: #{tpu_custom_call.1} parent=11 // pred_check
          %p276 = pneg %p214
        $region42: #{tpu_custom_call.1} parent=11 // pred_check_branch
          %278 = sbr.rel (%p276) target = $region44
        $region43: #{tpu_custom_call.1} parent=11 // pred_region
          _
        $region44: #{tpu_custom_call.1} parent=11 // pred_fallthru
          _
      $region12: #{tpu_custom_call.1} parent=5 // pred_fallthru
        _
      %p279 = scmp.lt.s32.totalorder %s20, 4
      // Predicated region
      $region45: #{tpu_custom_call.1} parent=5 // pred_check
        %p280 = pneg %p279
      $region46: #{tpu_custom_call.1} parent=5 // pred_check_branch
        %282 = sbr.rel (%p280) target = $region48
      $region47: #{tpu_custom_call.1} parent=5 // pred_region
        // Predicated region
        $region49: #{tpu_custom_call.1} parent=47 // pred_check
          %p283 = pneg %p40
        $region50: #{tpu_custom_call.1} parent=47 // pred_check_branch
          %285 = sbr.rel (%p283) target = $region52
        $region51: #{tpu_custom_call.1} parent=47 // pred_region
          %p286 = scmp.lt.s32.totalorder %s20, 3
          %s287 = scalar_select %p286, %s20, 3
          %s288 = smul.addr %s287, 8
          %s289 = scalar_lea.vmem %s0, %s288
        $region52: #{tpu_custom_call.1} parent=47 // pred_fallthru
          _
      $region48: #{tpu_custom_call.1} parent=5 // pred_fallthru
        _
      %p290 = scmp.le.s32.totalorder 1, %s20
      %p291 = scmp.lt.s32.totalorder %s20, 5
      %p292 = pnand %p290, %p291
      %p293 = pneg %p292
      // Predicated region
      $region53: #{tpu_custom_call.1} parent=5 // pred_check
        _
      $region54: #{tpu_custom_call.1} parent=5 // pred_check_branch
        %295 = sbr.rel (%p292) target = $region56
      $region55: #{tpu_custom_call.1} parent=5 // pred_region
        %s296 = ssub.s32 %s20, 1
        %p297 = scmp.lt.s32.totalorder %s25, 3
        %s298 = scalar_select %p297, %s25, 3
        %s299 = smul.addr %s298, 8
        %s300 = scalar_lea.vmem %s0, %s299
        %p301 = pneg %p46
        %p302 = pneg %p43
        %p303 = pneg %p67
        %p304 = pneg %p64
        %p305 = pneg %p88
        %p306 = pneg %p85
        %p307 = pneg %p109
        %p308 = pneg %p106
        %p309 = pneg %p130
        %p310 = pneg %p127
        %p311 = pneg %p151
        %p312 = pneg %p148
        %p313 = pneg %p172
        %p314 = pneg %p169
        %p315 = pneg %p193
        %p316 = pneg %p190
        %p317 = pneg %p214
        %p318 = pneg %p211
        %p319 = pneg %p240
        %p320 = pneg %p237
        %s321 = sand.u32 %s227, 1
        %s322 = scalar_lea.sflag [#allocation4], %s321
        %s323 = sand.u32 %s227, 1
        %s324 = smul.addr %s323, 8
        %s325 = scalar_lea.vmem [#allocation3], %s324
        %p326 = scmp.lt.s32.totalorder %s25, 3
        %s327 = scalar_select %p326, %s25, 3
        %s328 = smul.addr %s327, 8
        %s329 = scalar_lea.vmem %s0, %s328
        %v331 = vld [vmem:[%s329] sm:$0xff]
        %v332 = vmul.f32 %v331, %v331
        %vm333 = vcmask 261120
        %v334 = vsel %vm333, %v332, 0.0
        %v335 = vrot.slane %v334, 4
        %v336 = vadd.f32 %v334, %v335
        %v337 = vrot.slane %v336, 2
        %v338 = vadd.f32 %v336, %v337
        %v339 = vrot.slane %v338, 1
        %v340 = vadd.f32 %v338, %v339
        %v341 = vmax.f32 %v340, 1e-24
        %v342 = vrsqrt.pop %v341
        %v343 = vmul.f32 %v331, %v342
        %v344 = vpack.c.bf16 %v343, %v343
        %v345 = vld [vmem:[%s1] sm:$0xf]
        %v346 = vld [vmem:[%s1 + $0x4] sm:$0xf]
        %v347 = vld [vmem:[%s1 + $0x8] sm:$0xf]
        %v348 = vld [vmem:[%s1 + $0xc] sm:$0xf]
        %v349 = vld [vmem:[%s2] sm:$0x1]
        %v351 = vlaneseq
        %v352 = vshrl.u32 %v351, 7
        %v353 = vsub.s32 0, %v352
        %v354 = vrot.slane %v349, %v353
        %v360 = vunpack.c.l.b16 %v345
        %v361 = vunpack.c.l.b16 %v346
        %v362 = vunpack.c.l.b16 %v347
        %v363 = vunpack.c.l.b16 %v348
        %v364 = vpack.c.b16 %v361, %v360
        %v365 = vpack.c.b16 %v363, %v362
        %v369 = vsel %vm333, %v344, 0
        %371 = vmatprep.subr.bf16.mxu0 0
        %372 = vmatpush1.bf16.msra.mxu0 %v364
        %373 = vmatprep.subr.bf16.mxu0 0
        %374 = vmatpush1.bf16.msra.mxu0 %v365
        %375 = vmatprep.subr.bf16.mxu0 0
        %376 = vmatpush1.bf16.msra.mxu0 0
        %377 = vmatprep.subr.bf16.mxu0 0
        %378 = vmatpush1.bf16.msra.mxu0 0
        %379 = vmatprep.subr.bf16.mxu0 0
        %380 = vmatpush1.bf16.msra.mxu0 0
        %381 = vmatprep.subr.bf16.mxu0 0
        %382 = vmatpush1.bf16.msra.mxu0 0
        %383 = vmatprep.subr.bf16.mxu0 0
        %384 = vmatpush1.bf16.msra.mxu0 0
        %385 = vmatprep.subr.bf16.mxu0 0
        %386 = vmatpush1.bf16.msra.mxu0 0
        %387 = vmatprep.subr.bf16.mxu0 0
        %388 = vmatpush1.bf16.msra.mxu0 0
        %389 = vmatprep.subr.bf16.mxu0 0
        %390 = vmatpush1.bf16.msra.mxu0 0
        %391 = vmatprep.subr.bf16.mxu0 0
        %392 = vmatpush1.bf16.msra.mxu0 0
        %393 = vmatprep.subr.bf16.mxu0 0
        %394 = vmatpush1.bf16.msra.mxu0 0
        %395 = vmatprep.subr.bf16.mxu0 0
        %396 = vmatpush1.bf16.msra.mxu0 0
        %397 = vmatprep.subr.bf16.mxu0 0
        %398 = vmatpush1.bf16.msra.mxu0 0
        %399 = vmatprep.subr.bf16.mxu0 0
        %400 = vmatpush1.bf16.msra.mxu0 0
        %401 = vmatprep.subr.bf16.mxu0 0
        %402 = vmatpush1.bf16.msra.mxu0 0
        %403 = vmatprep.mubr.bf16.mxu0 0
        %404 = vmatmul.mubr.bf16.gmra.mrb[0].mxu0 %v369
        %v405 = vpop.f32.mrb[0].mxu0
        %v406 = vadd.f32 %v354, %v405
        %v407 = vpop.f32.mrb[0].mxu0
        %v408 = vpop.f32.mrb[0].mxu0
        %v409 = vpop.f32.mrb[0].mxu0
        %410 = vdwg.mxu0
        %v411 = vmax.f32 %v406, 0.0
        %v412 = vpack.c.bf16 %v411, %v411
        %v413 = vld [vmem:[%s3] sm:$0xf]
        %v414 = vld [vmem:[%s3 + $0x4] sm:$0xf]
        %v415 = vld [vmem:[%s3 + $0x8] sm:$0xf]
        %v416 = vld [vmem:[%s3 + $0xc] sm:$0x1]
        %v417 = vld [vmem:[%s4] sm:$0x1]
        %v419 = vlaneseq
        %v420 = vshrl.u32 %v419, 7
        %v421 = vsub.s32 0, %v420
        %v422 = vrot.slane %v417, %v421
        %v428 = vunpack.c.l.b16 %v413
        %v429 = vunpack.c.l.b16 %v414
        %v430 = vunpack.c.l.b16 %v415
        %v431 = vunpack.c.l.b16 %v416
        %v432 = vpack.c.b16 %v429, %v428
        %v433 = vpack.c.b16 %v431, %v430
        %vm435 = vcmask 203776
        %v437 = vsel %vm435, %v412, 0
        %vm439 = vcmask 1043456
        %vm440 = vcmask 1044480
        %v441 = vsel %vm439, 4294967295, 65535
        %v442 = vsel %vm440, %v441, 0
        %v444 = vand.u32 %v433, %v442
        %446 = vmatprep.subr.bf16.mxu0 0
        %447 = vmatpush1.bf16.msra.mxu0 %v432
        %448 = vmatprep.subr.bf16.mxu0 0
        %449 = vmatpush1.bf16.msra.mxu0 %v444
        %450 = vmatprep.subr.bf16.mxu0 0
        %451 = vmatpush1.bf16.msra.mxu0 0
        %452 = vmatprep.subr.bf16.mxu0 0
        %453 = vmatpush1.bf16.msra.mxu0 0
        %454 = vmatprep.subr.bf16.mxu0 0
        %455 = vmatpush1.bf16.msra.mxu0 0
        %456 = vmatprep.subr.bf16.mxu0 0
        %457 = vmatpush1.bf16.msra.mxu0 0
        %458 = vmatprep.subr.bf16.mxu0 0
        %459 = vmatpush1.bf16.msra.mxu0 0
        %460 = vmatprep.subr.bf16.mxu0 0
        %461 = vmatpush1.bf16.msra.mxu0 0
        %462 = vmatprep.subr.bf16.mxu0 0
        %463 = vmatpush1.bf16.msra.mxu0 0
        %464 = vmatprep.subr.bf16.mxu0 0
        %465 = vmatpush1.bf16.msra.mxu0 0
        %466 = vmatprep.subr.bf16.mxu0 0
        %467 = vmatpush1.bf16.msra.mxu0 0
        %468 = vmatprep.subr.bf16.mxu0 0
        %469 = vmatpush1.bf16.msra.mxu0 0
        %470 = vmatprep.subr.bf16.mxu0 0
        %471 = vmatpush1.bf16.msra.mxu0 0
        %472 = vmatprep.subr.bf16.mxu0 0
        %473 = vmatpush1.bf16.msra.mxu0 0
        %474 = vmatprep.subr.bf16.mxu0 0
        %475 = vmatpush1.bf16.msra.mxu0 0
        %476 = vmatprep.subr.bf16.mxu0 0
        %477 = vmatpush1.bf16.msra.mxu0 0
        %478 = vmatprep.mubr.bf16.mxu0 0
        %479 = vmatmul.mubr.bf16.gmra.mrb[0].mxu0 %v437
        %v480 = vpop.f32.mrb[0].mxu0
        %v481 = vadd.f32 %v422, %v480
        %v482 = vpop.f32.mrb[0].mxu0
        %v483 = vpop.f32.mrb[0].mxu0
        %v484 = vpop.f32.mrb[0].mxu0
        %485 = vdwg.mxu0
        %v486 = vmax.f32 %v481, 0.0
        %v487 = vpack.c.bf16 %v486, %v486
        %v488 = vld [vmem:[%s5] sm:$0xf]
        %v489 = vld [vmem:[%s5 + $0x4] sm:$0xf]
        %v490 = vld [vmem:[%s5 + $0x8] sm:$0xf]
        %v491 = vld [vmem:[%s5 + $0xc] sm:$0xf]
        %v492 = vld [vmem:[%s5 + $0x10] sm:$0xf]
        %v493 = vld [vmem:[%s5 + $0x14] sm:$0xf]
        %v494 = vld [vmem:[%s5 + $0x18] sm:$0x1]
        %v495 = vld [vmem:[%s6] sm:$0x1]
        %v497 = vlaneseq
        %v498 = vshrl.u32 %v497, 7
        %v499 = vsub.s32 0, %v498
        %v500 = vrot.slane %v495, %v499
        %v509 = vunpack.c.l.b16 %v488
        %v510 = vunpack.c.l.b16 %v489
        %v511 = vunpack.c.l.b16 %v490
        %v512 = vunpack.c.l.b16 %v491
        %v513 = vunpack.c.l.b16 %v492
        %v514 = vunpack.c.l.b16 %v493
        %v515 = vunpack.c.l.b16 %v494
        %v516 = vpack.c.b16 %v510, %v509
        %v517 = vpack.c.b16 %v512, %v511
        %v518 = vpack.c.b16 %v514, %v513
        %v519 = vpack.c.b16 %v515, %v515
        %vm523 = vcmask 408576
        %v525 = vsel %vm523, %v487, 0
        %vm527 = vcmask 1040384
        %v529 = vsel %vm527, %v519, 0
        %531 = vmatprep.subr.bf16.mxu0 0
        %532 = vmatpush1.bf16.msra.mxu0 %v516
        %533 = vmatprep.subr.bf16.mxu0 0
        %534 = vmatpush1.bf16.msra.mxu0 %v517
        %535 = vmatprep.subr.bf16.mxu0 0
        %536 = vmatpush1.bf16.msra.mxu0 %v518
        %537 = vmatprep.subr.bf16.mxu0 0
        %538 = vmatpush1.bf16.msra.mxu0 %v529
        %539 = vmatprep.subr.bf16.mxu0 0
        %540 = vmatpush1.bf16.msra.mxu0 0
        %541 = vmatprep.subr.bf16.mxu0 0
        %542 = vmatpush1.bf16.msra.mxu0 0
        %543 = vmatprep.subr.bf16.mxu0 0
        %544 = vmatpush1.bf16.msra.mxu0 0
        %545 = vmatprep.subr.bf16.mxu0 0
        %546 = vmatpush1.bf16.msra.mxu0 0
        %547 = vmatprep.subr.bf16.mxu0 0
        %548 = vmatpush1.bf16.msra.mxu0 0
        %549 = vmatprep.subr.bf16.mxu0 0
        %550 = vmatpush1.bf16.msra.mxu0 0
        %551 = vmatprep.subr.bf16.mxu0 0
        %552 = vmatpush1.bf16.msra.mxu0 0
        %553 = vmatprep.subr.bf16.mxu0 0
        %554 = vmatpush1.bf16.msra.mxu0 0
        %555 = vmatprep.subr.bf16.mxu0 0
        %556 = vmatpush1.bf16.msra.mxu0 0
        %557 = vmatprep.subr.bf16.mxu0 0
        %558 = vmatpush1.bf16.msra.mxu0 0
        %559 = vmatprep.subr.bf16.mxu0 0
        %560 = vmatpush1.bf16.msra.mxu0 0
        %561 = vmatprep.subr.bf16.mxu0 0
        %562 = vmatpush1.bf16.msra.mxu0 0
        %563 = vmatprep.mubr.bf16.mxu0 0
        %564 = vmatmul.mubr.bf16.gmra.mrb[0].mxu0 %v525
        %v565 = vpop.f32.mrb[0].mxu0
        %v566 = vadd.f32 %v500, %v565
        %v567 = vpop.f32.mrb[0].mxu0
        %v568 = vpop.f32.mrb[0].mxu0
        %v569 = vpop.f32.mrb[0].mxu0
        %570 = vdwg.mxu0
        %v571 = vmax.f32 %v566, 0.0
        %vm572 = vcmask 31744
        %v573 = vsel %vm572, %v566, -inf
        %574 = vmax.xlane.f32.xlu0 %v573
        %v575 = vpop.xlane.xlu0 %574
        %v576 = vsub.f32 %v566, %v575
        %v577 = vmul.f32 %v576, 1.442695
        %v578 = vpow.pop %v577
        %v579 = vsel %vm572, %v578, 0.0
        %580 = vadd.xlane.f32.xlu0 %v579
        %v581 = vpop.xlane.xlu0 %580
        %v582 = vlog2.pop %v581
        %v583 = vmul.f32 %v582, 0.6931472
        %v584 = vsub.f32 %v576, %v583
        %v585 = vpack.c.bf16 %v571, %v571
        %v586 = vld [vmem:[%s7] sm:$0xf]
        %v587 = vld [vmem:[%s7 + $0x4] sm:$0xf]
        %v588 = vld [vmem:[%s7 + $0x8] sm:$0xf]
        %v589 = vld [vmem:[%s7 + $0xc] sm:$0x1]
        %v590 = vld [vmem:[#allocation2] sm:$0x1]
        %v592 = vlaneseq
        %v593 = vshrl.u32 %v592, 7
        %v594 = vsub.s32 0, %v593
        %v595 = vrot.slane %v590, %v594
        %598 = vrot.lane.b32.xlu0 %v585, 124
        %v599 = vpop.permute.xlu0 %598
        %v604 = vunpack.c.l.b16 %v586
        %v605 = vunpack.c.l.b16 %v587
        %v606 = vunpack.c.l.b16 %v588
        %v607 = vunpack.c.l.b16 %v589
        %v608 = vpack.c.b16 %v605, %v604
        %v609 = vpack.c.b16 %v607, %v606
        %v612 = vsel %vm435, %v599, 0
        %v615 = vand.u32 %v609, %v442
        %617 = vmatprep.subr.bf16.mxu0 0
        %618 = vmatpush1.bf16.msra.mxu0 %v608
        %619 = vmatprep.subr.bf16.mxu0 0
        %620 = vmatpush1.bf16.msra.mxu0 %v615
        %621 = vmatprep.subr.bf16.mxu0 0
        %622 = vmatpush1.bf16.msra.mxu0 0
        %623 = vmatprep.subr.bf16.mxu0 0
        %624 = vmatpush1.bf16.msra.mxu0 0
        %625 = vmatprep.subr.bf16.mxu0 0
        %626 = vmatpush1.bf16.msra.mxu0 0
        %627 = vmatprep.subr.bf16.mxu0 0
        %628 = vmatpush1.bf16.msra.mxu0 0
        %629 = vmatprep.subr.bf16.mxu0 0
        %630 = vmatpush1.bf16.msra.mxu0 0
        %631 = vmatprep.subr.bf16.mxu0 0
        %632 = vmatpush1.bf16.msra.mxu0 0
        %633 = vmatprep.subr.bf16.mxu0 0
        %634 = vmatpush1.bf16.msra.mxu0 0
        %635 = vmatprep.subr.bf16.mxu0 0
        %636 = vmatpush1.bf16.msra.mxu0 0
        %637 = vmatprep.subr.bf16.mxu0 0
        %638 = vmatpush1.bf16.msra.mxu0 0
        %639 = vmatprep.subr.bf16.mxu0 0
        %640 = vmatpush1.bf16.msra.mxu0 0
        %641 = vmatprep.subr.bf16.mxu0 0
        %642 = vmatpush1.bf16.msra.mxu0 0
        %643 = vmatprep.subr.bf16.mxu0 0
        %644 = vmatpush1.bf16.msra.mxu0 0
        %645 = vmatprep.subr.bf16.mxu0 0
        %646 = vmatpush1.bf16.msra.mxu0 0
        %647 = vmatprep.subr.bf16.mxu0 0
        %648 = vmatpush1.bf16.msra.mxu0 0
        %649 = vmatprep.mubr.bf16.mxu0 0
        %650 = vmatmul.mubr.bf16.gmra.mrb[0].mxu0 %v612
        %v651 = vpop.f32.mrb[0].mxu0
        %v652 = vadd.f32 %v595, %v651
        %v653 = vpop.f32.mrb[0].mxu0
        %v654 = vpop.f32.mrb[0].mxu0
        %v655 = vpop.f32.mrb[0].mxu0
        %656 = vdwg.mxu0
        %v657 = vtanh.pop %v652
        %659 = vrot.lane.b32.xlu0 %v657, 4
        %v660 = vpop.permute.xlu0 %659
        %v662 = vsel %vm572, %v584, %v660
        %vm663 = vcmask 39936
        %v664 = vsel %vm663, %v662, 0.0
        %665 = vst [vmem:[%s325] sm:$0xff] %v664
        %s666 = sand.u32 %s227, 1
        %s667 = scalar_lea.sflag [#allocation4], %s666
        %s668 = sand.u32 %s227, 1
        %s669 = smul.addr %s668, 8
        %s670 = scalar_lea.vmem [#allocation3], %s669
        // Predicated region
        $region57: #{tpu_custom_call.1} parent=55 // pred_check
          %p671 = pneg %p237
        $region58: #{tpu_custom_call.1} parent=55 // pred_check_branch
          %673 = sbr.rel (%p671) target = $region60
        $region59: #{tpu_custom_call.1} parent=55 // pred_region
          %s675 = ssub.s32 128, 128
          %676 = vsyncadd %s667, %s675
          %s677 = smul.addr %s25, 128
          %s678 = scalar_lea.hbm %s9, %s677
          %s680 = sshll.u32 %s670, 4
          %s681 = int_to_ptr.vmem [resolvable:$true] %s680
          %683 = dma.vmem_to_hbm [thread:$0]  %s681, 128, %s678, %s667
        $region60: #{tpu_custom_call.1} parent=55 // pred_fallthru
          _
      $region56: #{tpu_custom_call.1} parent=5 // pred_fallthru
        _
      %p684 = scmp.le.s32.totalorder 2, %s20
      // Predicated region
      $region61: #{tpu_custom_call.1} parent=5 // pred_check
        %p685 = pneg %p684
      $region62: #{tpu_custom_call.1} parent=5 // pred_check_branch
        %687 = sbr.rel (%p685) target = $region64
      $region63: #{tpu_custom_call.1} parent=5 // pred_region
        %s688 = ssub.s32 %s20, 2
        // Predicated region
        $region65: #{tpu_custom_call.1} parent=63 // pred_check
          %p689 = pneg %p243
        $region66: #{tpu_custom_call.1} parent=63 // pred_check_branch
          %691 = sbr.rel (%p689) target = $region68
        $region67: #{tpu_custom_call.1} parent=63 // pred_region
          %s692 = sand.u32 %s228, 1
          %s693 = scalar_lea.sflag [#allocation4], %s692
          %s694 = sand.u32 %s228, 1
          %s695 = smul.addr %s694, 8
          %s696 = scalar_lea.vmem [#allocation3], %s695
          %697 = dma.done %s693, 128
        $region68: #{tpu_custom_call.1} parent=63 // pred_fallthru
          _
      $region64: #{tpu_custom_call.1} parent=5 // pred_fallthru
        _
    $region6: #{tpu_custom_call.1} parent=1 // loop_footer
      %s24 = sadd.s32 1, %s20
    $region7: #{tpu_custom_call.1} parent=1 // loop_footer_branch
      %19 = sbr.rel target = $region3
    $region8: #{tpu_custom_call.1} parent=1 // loop_exit
      _
    %698 = vsyncpa [#allocation4], 1
    %s699 = scalar_lea.sflag [#allocation4], 1
    %700 = vsyncpa %s699, 1

</llo_original>
